<compile_context>
chip_gen: v7x
topology: tpu7x:2x2x1
jax: 0.10.0
libtpu: 0.0.40
codegen_flags: <defaults>
</compile_context>

<pallas_src>
import jax
import jax.numpy as jnp
from jax.experimental import pallas as pl
from jax.experimental.pallas import tpu as pltpu


def _round_up(x, m):
    return ((x + m - 1) // m) * m


# ----------------------------------------------------------------------------
# Forward kernel: vectorized one-hot MXU gather + fused dot over embed_dim.
# ----------------------------------------------------------------------------
def bandit_mf_kernel(prod_ids_ref, user_ids_ref, prod_t_ref, user_t_ref, out_ref):
    # prod_ids_ref / user_ids_ref : VMEM int32 (1, TN)     (per-tile id blocks)
    # prod_t_ref   / user_t_ref   : VMEM f32 (D_pad, P_pad) (transposed, zero-padded)
    # out_ref                     : VMEM f32 (1, TN)        (lane-dense output tile)
    p_pad = prod_t_ref.shape[1]
    tn = out_ref.shape[1]

    # Transposed one-hots: onehot[p, i] = (ids[i] == p).  Values are exactly
    # 0/1 so the MXU gather below is bit-exact with f32 accumulation.
    row_ids = jax.lax.broadcasted_iota(jnp.int32, (p_pad, tn), 0)
    onehot_p = (row_ids == prod_ids_ref[...]).astype(jnp.float32)   # (P_pad, TN)
    onehot_u = (row_ids == user_ids_ref[...]).astype(jnp.float32)   # (P_pad, TN)

    # Gather = matmul: (D_pad, P_pad) @ (P_pad, TN) -> (D_pad, TN) per table.
    a = jnp.dot(prod_t_ref[...], onehot_p, preferred_element_type=jnp.float32)
    b = jnp.dot(user_t_ref[...], onehot_u, preferred_element_type=jnp.float32)

    # dot over embed_dim: elementwise mul + sublane reduce -> (1, TN) lane-dense.
    out_ref[...] = jnp.sum(a * b, axis=0, keepdims=True)


def bandit_mf_forward(products, users, product_embedding, user_embedding):
    """products, users: int (N,). Embedding tables: (rows, embed_dim) float32."""
    n = products.shape[0]
    p_rows, d = product_embedding.shape
    u_rows, d_u = user_embedding.shape
    assert d == d_u

    # Batch tiling: lane-dense tiles, >= 2 tiles once N exceeds one tile so the
    # "parallel" grid axis actually shards across both TensorCores on v7x.
    if n <= 128:
        tn = 128
    else:
        tn = min(512, _round_up((n + 1) // 2, 128))
    n_pad = _round_up(n, tn)
    num_tiles = n_pad // tn

    d_pad = _round_up(d, 8)
    p_pad = _round_up(max(p_rows, u_rows), 128)

    # Clamp each id array against ITS OWN table's row count (no OOB reads; note
    # PyTorch nn.Embedding would raise), pad batch with id 0 (discarded below).
    def prep_ids(ids, rows):
        ids = jnp.clip(jnp.asarray(ids).astype(jnp.int32), 0, rows - 1)
        ids = jnp.pad(ids, (0, n_pad - n))
        return ids.reshape(num_tiles, 1, tn)

    prod_ids = prep_ids(products, p_rows)
    user_ids = prep_ids(users, u_rows)

    # Host-side transpose + zero-pad: (rows, D) -> (D_pad, P_pad).  Padded rows
    # / columns are zero and never selected by the one-hots, so exact.
    def prep_table(t):
        return (jnp.zeros((d_pad, p_pad), jnp.float32)
                .at[:d, :t.shape[0]].set(t.T.astype(jnp.float32)))

    prod_t = prep_table(product_embedding)
    user_t = prep_table(user_embedding)

    # VMEM budget: resident tables + double-buffered id/out blocks + in-kernel
    # temporaries (one-hots, gathered rows) + headroom.  Capped under v7x 64 MiB.
    table_bytes = d_pad * p_pad * 4
    ids_bytes = tn * 4
    vmem_limit = int(2 * 2 * table_bytes          # two tables (double-buffered)
                     + 2 * 2 * 2 * ids_bytes      # two id inputs, 2 buffers
                     + 2 * 2 * ids_bytes          # output blocks, 2 buffers
                     + 2 * p_pad * tn * 4         # one-hot temporaries
                     + 2 * d_pad * tn * 4         # gathered-row temporaries
                     + (4 << 20))                 # internal scratch headroom
    vmem_limit = min(vmem_limit, 60 << 20)

    # Memory-bound roofline: ids in, tables once, output out.
    cost = pl.CostEstimate(
        flops=2 * (2 * d_pad * p_pad * tn) * num_tiles,
        transcendentals=0,
        bytes_accessed=2 * n_pad * 4 + 2 * table_bytes + n_pad * 4,
    )

    grid_spec = pltpu.PrefetchScalarGridSpec(
        num_scalar_prefetch=0,
        grid=(num_tiles,),
        in_specs=[
            pl.BlockSpec((None, 1, tn), lambda t: (t, 0, 0)),     # product ids
            pl.BlockSpec((None, 1, tn), lambda t: (t, 0, 0)),     # user ids
            pl.BlockSpec((d_pad, p_pad), lambda t: (0, 0)),       # product table (T)
            pl.BlockSpec((d_pad, p_pad), lambda t: (0, 0)),       # user table (T)
        ],
        out_specs=pl.BlockSpec((None, 1, tn), lambda t: (t, 0, 0)),
    )

    out = pl.pallas_call(
        bandit_mf_kernel,
        out_shape=jax.ShapeDtypeStruct((num_tiles, 1, tn), jnp.float32),
        grid_spec=grid_spec,
        compiler_params=pltpu.CompilerParams(
            dimension_semantics=("parallel",),    # shard batch tiles across TCs (v7x)
            vmem_limit_bytes=vmem_limit,
        ),
        cost_estimate=cost,
    )(prod_ids, user_ids, prod_t, user_t)
    return out.reshape(n_pad)[:n]


# ----------------------------------------------------------------------------
# get_logits fast path: all products vs. one user -> tiled matvec.
# ----------------------------------------------------------------------------
def bandit_mf_logits_kernel(uid_ref, user_emb_ref, prod_t_ref, out_ref):
    # uid_ref      : SMEM int32 (1,)          (scalar prefetch)
    # user_emb_ref : VMEM f32 (U_pad, D_pad)  (resident, zero-padded)
    # prod_t_ref   : VMEM f32 (D_pad, TP)     (pre-transposed table, P-tile)
    # out_ref      : VMEM f32 (1, TP)         (lane-dense logits tile)
    u = uid_ref[0]
    urow = user_emb_ref[pl.ds(u, 1), :]                              # (1, D_pad)
    out_ref[...] = jnp.dot(urow, prod_t_ref[...],
                           preferred_element_type=jnp.float32)       # (1, TP)


def bandit_mf_get_logits(product_embedding, user_embedding, last_product_viewed):
    p, d = product_embedding.shape
    u_rows = user_embedding.shape[0]
    d_pad = _round_up(d, 8)
    u_pad = _round_up(u_rows, 8)
    p_pad = _round_up(p, 128)
    tp = min(p_pad, 512)
    num_tiles = p_pad // tp

    uid = jnp.clip(jnp.asarray([last_product_viewed], dtype=jnp.int32), 0, u_rows - 1)

    user_pad = (jnp.zeros((u_pad, d_pad), jnp.float32)
                .at[:u_rows, :d].set(user_embedding.astype(jnp.float32)))
    prod_t = (jnp.zeros((d_pad, p_pad), jnp.float32)
              .at[:d, :p].set(product_embedding.T.astype(jnp.float32)))

    vmem_limit = int(2 * u_pad * d_pad * 4 + 4 * d_pad * tp * 4 + 4 * tp * 4 + (2 << 20))

    grid_spec = pltpu.PrefetchScalarGridSpec(
        num_scalar_prefetch=1,
        grid=(num_tiles,),
        in_specs=[
            pl.BlockSpec((u_pad, d_pad), lambda t, uid: (0, 0)),   # user table (resident)
            pl.BlockSpec((d_pad, tp), lambda t, uid: (0, t)),      # product table (T), P-tiled
        ],
        out_specs=pl.BlockSpec((1, tp), lambda t, uid: (0, t)),
    )

    out = pl.pallas_call(
        bandit_mf_logits_kernel,
        out_shape=jax.ShapeDtypeStruct((1, p_pad), jnp.float32),
        grid_spec=grid_spec,
        compiler_params=pltpu.CompilerParams(
            dimension_semantics=("parallel",),
            vmem_limit_bytes=vmem_limit,
        ),
    )(uid, user_pad, prod_t)
    return out.reshape(p_pad)[:p]


def reference_forward(products, users, product_embedding, user_embedding):
    a = product_embedding[products]
    b = user_embedding[users]
    return jnp.sum(a * b, axis=1)


if __name__ == "__main__":
    num_products = 10
    embed_dim = 5

    key = jax.random.PRNGKey(0)
    k1, k2, k3, k4, k5, k6, k7 = jax.random.split(key, 7)

    # nn.Embedding default init: N(0, 1)
    product_embedding = jax.random.normal(k1, (num_products, embed_dim), dtype=jnp.float32)
    user_embedding = jax.random.normal(k2, (num_products, embed_dim), dtype=jnp.float32)

    # 1) forward(products, users): small batch, not a multiple of 128 (padding path).
    batch = 11
    products = jax.random.randint(k3, (batch,), 0, num_products, dtype=jnp.int32)
    users = jax.random.randint(k4, (batch,), 0, num_products, dtype=jnp.int32)
    out = jax.block_until_ready(
        bandit_mf_forward(products, users, product_embedding, user_embedding))
    ref = reference_forward(products, users, product_embedding, user_embedding)
    assert out.shape == (batch,) and out.dtype == jnp.float32
    assert jnp.allclose(out, ref, atol=1e-5, rtol=1e-5)

    # 2) forward(products) path: users = full(last_product_viewed).
    last_product_viewed = int(jax.random.randint(k5, (), 0, num_products))
    users_const = jnp.full((batch,), last_product_viewed, dtype=jnp.int32)
    out2 = jax.block_until_ready(
        bandit_mf_forward(products, users_const, product_embedding, user_embedding))
    ref2 = reference_forward(products, users_const, product_embedding, user_embedding)
    assert jnp.allclose(out2, ref2, atol=1e-5, rtol=1e-5)

    # 3) multi-tile batch: exercises grid iteration, batch padding, parallel axis.
    big = 300
    products_b = jax.random.randint(k6, (big,), 0, num_products, dtype=jnp.int32)
    users_b = jax.random.randint(k7, (big,), 0, num_products, dtype=jnp.int32)
    out3 = jax.block_until_ready(
        bandit_mf_forward(products_b, users_b, product_embedding, user_embedding))
    ref3 = reference_forward(products_b, users_b, product_embedding, user_embedding)
    assert out3.shape == (big,)
    assert jnp.allclose(out3, ref3, atol=1e-5, rtol=1e-5)

    # 4) get_logits() fast path: all products vs. last product viewed (tiled matvec).
    logits = jax.block_until_ready(
        bandit_mf_get_logits(product_embedding, user_embedding, last_product_viewed))
    all_products = jnp.arange(num_products, dtype=jnp.int32)
    all_users = jnp.full((num_products,), last_product_viewed, dtype=jnp.int32)
    ref_logits = reference_forward(all_products, all_users, product_embedding, user_embedding)
    assert logits.shape == (num_products,)
    assert jnp.allclose(logits, ref_logits, atol=1e-5, rtol=1e-5)

    print("KERNEL_OK")
</pallas_src>

<mosaic_0001>
module attributes {stable_mosaic.version = 11 : i64} {
  func.func @bandit_mf_kernel(%arg0: i32, %arg1: memref<1x1x128xi32, #tpu.memory_space<vmem>>, %arg2: memref<1x1x128xi32, #tpu.memory_space<vmem>>, %arg3: memref<8x128xf32, #tpu.memory_space<vmem>>, %arg4: memref<8x128xf32, #tpu.memory_space<vmem>>, %arg5: memref<1x1x128xf32, #tpu.memory_space<vmem>>) attributes {dimension_semantics = [#tpu.dimension_semantics<parallel>], iteration_bounds = array<i64: 1>, scalar_prefetch = 0 : i64, scratch_operands = 0 : i64, tpu.core_type = #tpu.core_type<tc>, window_params = [{transform_indices = @transform_0, window_bounds = array<i64: 1, 1, 128>}, {transform_indices = @transform_1, window_bounds = array<i64: 1, 1, 128>}, {pipeline_mode = #tpu.pipeline_mode<synchronous>, transform_indices = @transform_2, window_bounds = array<i64: 8, 128>}, {pipeline_mode = #tpu.pipeline_mode<synchronous>, transform_indices = @transform_3, window_bounds = array<i64: 8, 128>}, {transform_indices = @transform_4, window_bounds = array<i64: 1, 1, 128>}]} {
    %0 = tpu.iota {dimensions = array<i32: 0>} : vector<128x128xi32>
    %c0 = arith.constant 0 : index
    %c0_0 = arith.constant 0 : index
    %c0_1 = arith.constant 0 : index
    %1 = vector.load %arg1[%c0, %c0_0, %c0_1] : memref<1x1x128xi32, #tpu.memory_space<vmem>>, vector<1x1x128xi32>
    %2 = vector.shape_cast %1 : vector<1x1x128xi32> to vector<1x128xi32>
    %3 = vector.broadcast %2 : vector<1x128xi32> to vector<128x128xi32>
    %4 = arith.cmpi eq, %0, %3 : vector<128x128xi32>
    %5 = arith.extui %4 : vector<128x128xi1> to vector<128x128xi32>
    %6 = arith.sitofp %5 : vector<128x128xi32> to vector<128x128xf32>
    %c0_2 = arith.constant 0 : index
    %c0_3 = arith.constant 0 : index
    %c0_4 = arith.constant 0 : index
    %7 = vector.load %arg2[%c0_2, %c0_3, %c0_4] : memref<1x1x128xi32, #tpu.memory_space<vmem>>, vector<1x1x128xi32>
    %8 = vector.shape_cast %7 : vector<1x1x128xi32> to vector<1x128xi32>
    %9 = vector.broadcast %8 : vector<1x128xi32> to vector<128x128xi32>
    %10 = arith.cmpi eq, %0, %9 : vector<128x128xi32>
    %11 = arith.extui %10 : vector<128x128xi1> to vector<128x128xi32>
    %12 = arith.sitofp %11 : vector<128x128xi32> to vector<128x128xf32>
    %c0_5 = arith.constant 0 : index
    %c0_6 = arith.constant 0 : index
    %13 = vector.load %arg3[%c0_5, %c0_6] : memref<8x128xf32, #tpu.memory_space<vmem>>, vector<8x128xf32>
    %cst = arith.constant dense<0.000000e+00> : vector<8x128xf32>
    %14 = tpu.matmul %13, %6, %cst {dimension_numbers = #tpu.dot_dimension_numbers<[1], [0], [0], [1], [0, 0, 1, 1], [], []>} : vector<8x128xf32>, vector<128x128xf32>, vector<8x128xf32> -> vector<8x128xf32>
    %c0_7 = arith.constant 0 : index
    %c0_8 = arith.constant 0 : index
    %15 = vector.load %arg4[%c0_7, %c0_8] : memref<8x128xf32, #tpu.memory_space<vmem>>, vector<8x128xf32>
    %cst_9 = arith.constant dense<0.000000e+00> : vector<8x128xf32>
    %16 = tpu.matmul %15, %12, %cst_9 {dimension_numbers = #tpu.dot_dimension_numbers<[1], [0], [0], [1], [0, 0, 1, 1], [], []>} : vector<8x128xf32>, vector<128x128xf32>, vector<8x128xf32> -> vector<8x128xf32>
    %17 = arith.mulf %14, %16 : vector<8x128xf32>
    %cst_10 = arith.constant dense<0.000000e+00> : vector<128xf32>
    %18 = vector.multi_reduction <add>, %17, %cst_10 [0] : vector<8x128xf32> to vector<128xf32>
    %19 = vector.shape_cast %18 : vector<128xf32> to vector<1x128xf32>
    %c0_11 = arith.constant 0 : index
    %c0_12 = arith.constant 0 : index
    %c0_13 = arith.constant 0 : index
    %20 = vector.load %arg5[%c0_11, %c0_12, %c0_13] : memref<1x1x128xf32, #tpu.memory_space<vmem>>, vector<1x1x128xf32>
    %21 = vector.shape_cast %20 : vector<1x1x128xf32> to vector<1x128xf32>
    %22 = vector.shape_cast %19 : vector<1x128xf32> to vector<1x1x128xf32>
    tpu.vector_store %arg5[%c0_11, %c0_12, %c0_13], %22 {strides = array<i32>} : memref<1x1x128xf32, #tpu.memory_space<vmem>>, vector<1x1x128xf32>,
    return
  }
  func.func @transform_0(%arg0: i32) -> (i32, i32, i32) {
    %c0_i32 = arith.constant 0 : i32
    %c0_i32_0 = arith.constant 0 : i32
    %c0_i32_1 = arith.constant 0 : i32
    return %arg0, %c0_i32, %c0_i32_0 : i32, i32, i32
  }
  func.func @transform_1(%arg0: i32) -> (i32, i32, i32) {
    %c0_i32 = arith.constant 0 : i32
    %c0_i32_0 = arith.constant 0 : i32
    %c0_i32_1 = arith.constant 0 : i32
    return %arg0, %c0_i32, %c0_i32_0 : i32, i32, i32
  }
  func.func @transform_2(%arg0: i32) -> (i32, i32) {
    %c0_i32 = arith.constant 0 : i32
    %c0_i32_0 = arith.constant 0 : i32
    %c0_i32_1 = arith.constant 0 : i32
    return %c0_i32, %c0_i32_0 : i32, i32
  }
  func.func @transform_3(%arg0: i32) -> (i32, i32) {
    %c0_i32 = arith.constant 0 : i32
    %c0_i32_0 = arith.constant 0 : i32
    %c0_i32_1 = arith.constant 0 : i32
    return %c0_i32, %c0_i32_0 : i32, i32
  }
  func.func @transform_4(%arg0: i32) -> (i32, i32, i32) {
    %c0_i32 = arith.constant 0 : i32
    %c0_i32_0 = arith.constant 0 : i32
    %c0_i32_1 = arith.constant 0 : i32
    return %arg0, %c0_i32, %c0_i32_0 : i32, i32, i32
  }
}

</mosaic_0001>

<llo_original>
// kernel: tpu_custom_call.1
$region0: #{tpu_custom_call.1}
  #allocation0 [shape = 'u32[]', space=smem, size = 0x4, offset = 0x4, fixed_abs, tag = 'smem constant byte address 0x4 - core index']
  #allocation1 [shape = 'u32[144,128]{1,0:T(1,128)}', space=vmem, size = 0x12000, scoped, tag = 'internal scratch']
  %s0 = inlined_call_operand.hbm [shape: s32[1,1,128], index: 0, kind: input, shape index: {}]
  %s1 = inlined_call_operand.vmem [shape: s32[1,1,128], index: 1, kind: input, shape index: {}]
  %s2 = inlined_call_operand.hbm [shape: f32[8,128], index: 2, kind: input, shape index: {}]
  %s3 = inlined_call_operand.vmem [shape: f32[8,128], index: 3, kind: input, shape index: {}]
  %s4 = inlined_call_operand.hbm [shape: f32[1,1,128], index: 4, kind: output, shape index: {}]
  %s5 = sld [smem:[#allocation0]]
  $region34: #{tpu_custom_call.1} parent=0
    _
  %s7 = ssub.s32 1, %s5
  %s8 = scalar_select 0, %s7, %s5
  $region1: #{tpu_custom_call.1} parent=0
    #allocation2 [shape = 'u8[512]{0}', space=vmem, size = 0x400, scoped, tag = 'input window, operand 0, single buffered']
    #allocation3 [shape = 's32[1]{0}', space=sflag, size = 0x4, scoped, tag = 'scoped memory for tpu_custom_call.1']
    #allocation4 [shape = 's32[1]{0}', space=sflag, size = 0x4, scoped, tag = 'scoped memory for tpu_custom_call.1']
    #allocation5 [shape = 'u8[4096]{0}', space=vmem, size = 0x1000, scoped, tag = 'input window, operand 2, single buffered']
    #allocation6 [shape = 's32[1]{0}', space=sflag, size = 0x4, scoped, tag = 'scoped memory for tpu_custom_call.1']
    #allocation7 [shape = 'u8[512]{0}', space=vmem, size = 0x400, scoped, tag = 'output window, operand 0, single buffered']
    %9 = vsyncpa [#allocation3], 0
    %10 = vsyncpa [#allocation6], 0
    %11 = vsyncpa [#allocation4], 0
    // Predicated region
    $region2: #{tpu_custom_call.1} parent=1 // pred_check
      _
    $region3: #{tpu_custom_call.1} parent=1 // pred_check_branch
      %13 = sbr.rel (0) target = $region5
    $region4: #{tpu_custom_call.1} parent=1 // pred_region
      %s15 = ssub.s32 16, 16
      %16 = vsyncadd [#allocation3], %s15
      %s18 = sshll.u32 [#allocation2], 4
      %s19 = int_to_ptr.vmem [resolvable:$true] %s18
      %21 = dma.hbm_to_vmem [thread:$0]  %s0, 16, %s19, [#allocation3]
    $region5: #{tpu_custom_call.1} parent=1 // pred_fallthru
      _
    // Predicated region
    $region6: #{tpu_custom_call.1} parent=1 // pred_check
      _
    $region7: #{tpu_custom_call.1} parent=1 // pred_check_branch
      %23 = sbr.rel (0) target = $region9
    $region8: #{tpu_custom_call.1} parent=1 // pred_region
      _
    $region9: #{tpu_custom_call.1} parent=1 // pred_fallthru
      _
    // Predicated region
    $region10: #{tpu_custom_call.1} parent=1 // pred_check
      _
    $region11: #{tpu_custom_call.1} parent=1 // pred_check_branch
      %25 = sbr.rel (0) target = $region13
    $region12: #{tpu_custom_call.1} parent=1 // pred_region
      %s27 = ssub.s32 128, 128
      %28 = vsyncadd [#allocation6], %s27
      %s30 = sshll.u32 [#allocation5], 4
      %s31 = int_to_ptr.vmem [resolvable:$true] %s30
      %33 = dma.hbm_to_vmem [thread:$0]  %s2, 128, %s31, [#allocation6]
    $region13: #{tpu_custom_call.1} parent=1 // pred_fallthru
      _
    // Predicated region
    $region14: #{tpu_custom_call.1} parent=1 // pred_check
      _
    $region15: #{tpu_custom_call.1} parent=1 // pred_check_branch
      %35 = sbr.rel (0) target = $region17
    $region16: #{tpu_custom_call.1} parent=1 // pred_region
      _
    $region17: #{tpu_custom_call.1} parent=1 // pred_fallthru
      _
    // Predicated region
    $region18: #{tpu_custom_call.1} parent=1 // pred_check
      _
    $region19: #{tpu_custom_call.1} parent=1 // pred_check_branch
      %37 = sbr.rel (0) target = $region21
    $region20: #{tpu_custom_call.1} parent=1 // pred_region
      %38 = dma.done [#allocation3], 16
    $region21: #{tpu_custom_call.1} parent=1 // pred_fallthru
      _
    // Predicated region
    $region22: #{tpu_custom_call.1} parent=1 // pred_check
      _
    $region23: #{tpu_custom_call.1} parent=1 // pred_check_branch
      %40 = sbr.rel (0) target = $region25
    $region24: #{tpu_custom_call.1} parent=1 // pred_region
      %41 = dma.done [#allocation6], 128
    $region25: #{tpu_custom_call.1} parent=1 // pred_fallthru
      _
    %v42 = vlaneseq
    %v43 = vshrl.u32 %v42, 7
    %v44 = vadd.s32 %v43, 8
    %v45 = vadd.s32 %v43, 16
    %v46 = vadd.s32 %v43, 24
    %v47 = vadd.s32 %v43, 32
    %v48 = vadd.s32 %v43, 40
    %v49 = vadd.s32 %v43, 48
    %v50 = vadd.s32 %v43, 56
    %v51 = vadd.s32 %v43, 64
    %v52 = vadd.s32 %v43, 72
    %v53 = vadd.s32 %v43, 80
    %v54 = vadd.s32 %v43, 88
    %v55 = vadd.s32 %v43, 96
    %v56 = vadd.s32 %v43, 104
    %v57 = vadd.s32 %v43, 112
    %v58 = vadd.s32 %v43, 120
    %v59 = vld [vmem:[#allocation2] sm:$0x1]
    %v60 = vlaneseq
    %v61 = vshrl.u32 %v60, 7
    %v62 = vsub.s32 0, %v61
    %v63 = vrot.slane %v59, %v62
    %vm64 = vcmp.eq.s32.totalorder %v43, %v63
    %vm65 = vcmp.eq.s32.totalorder %v44, %v63
    %vm66 = vcmp.eq.s32.totalorder %v45, %v63
    %vm67 = vcmp.eq.s32.totalorder %v46, %v63
    %vm68 = vcmp.eq.s32.totalorder %v47, %v63
    %vm69 = vcmp.eq.s32.totalorder %v48, %v63
    %vm70 = vcmp.eq.s32.totalorder %v49, %v63
    %vm71 = vcmp.eq.s32.totalorder %v50, %v63
    %vm72 = vcmp.eq.s32.totalorder %v51, %v63
    %vm73 = vcmp.eq.s32.totalorder %v52, %v63
    %vm74 = vcmp.eq.s32.totalorder %v53, %v63
    %vm75 = vcmp.eq.s32.totalorder %v54, %v63
    %vm76 = vcmp.eq.s32.totalorder %v55, %v63
    %vm77 = vcmp.eq.s32.totalorder %v56, %v63
    %vm78 = vcmp.eq.s32.totalorder %v57, %v63
    %vm79 = vcmp.eq.s32.totalorder %v58, %v63
    %v80 = vsel %vm64, 1, 0
    %v81 = vsel %vm65, 1, 0
    %v82 = vsel %vm66, 1, 0
    %v83 = vsel %vm67, 1, 0
    %v84 = vsel %vm68, 1, 0
    %v85 = vsel %vm69, 1, 0
    %v86 = vsel %vm70, 1, 0
    %v87 = vsel %vm71, 1, 0
    %v88 = vsel %vm72, 1, 0
    %v89 = vsel %vm73, 1, 0
    %v90 = vsel %vm74, 1, 0
    %v91 = vsel %vm75, 1, 0
    %v92 = vsel %vm76, 1, 0
    %v93 = vsel %vm77, 1, 0
    %v94 = vsel %vm78, 1, 0
    %v95 = vsel %vm79, 1, 0
    %v96 = vcvt.s32.f32 %v80
    %v97 = vcvt.s32.f32 %v81
    %v98 = vcvt.s32.f32 %v82
    %v99 = vcvt.s32.f32 %v83
    %v100 = vcvt.s32.f32 %v84
    %v101 = vcvt.s32.f32 %v85
    %v102 = vcvt.s32.f32 %v86
    %v103 = vcvt.s32.f32 %v87
    %v104 = vcvt.s32.f32 %v88
    %v105 = vcvt.s32.f32 %v89
    %v106 = vcvt.s32.f32 %v90
    %v107 = vcvt.s32.f32 %v91
    %v108 = vcvt.s32.f32 %v92
    %v109 = vcvt.s32.f32 %v93
    %v110 = vcvt.s32.f32 %v94
    %v111 = vcvt.s32.f32 %v95
    %v112 = vld [vmem:[%s1] sm:$0x1]
    %v113 = vlaneseq
    %v114 = vshrl.u32 %v113, 7
    %v115 = vsub.s32 0, %v114
    %v116 = vrot.slane %v112, %v115
    %vm117 = vcmp.eq.s32.totalorder %v43, %v116
    %vm118 = vcmp.eq.s32.totalorder %v44, %v116
    %vm119 = vcmp.eq.s32.totalorder %v45, %v116
    %vm120 = vcmp.eq.s32.totalorder %v46, %v116
    %vm121 = vcmp.eq.s32.totalorder %v47, %v116
    %vm122 = vcmp.eq.s32.totalorder %v48, %v116
    %vm123 = vcmp.eq.s32.totalorder %v49, %v116
    %vm124 = vcmp.eq.s32.totalorder %v50, %v116
    %vm125 = vcmp.eq.s32.totalorder %v51, %v116
    %vm126 = vcmp.eq.s32.totalorder %v52, %v116
    %vm127 = vcmp.eq.s32.totalorder %v53, %v116
    %vm128 = vcmp.eq.s32.totalorder %v54, %v116
    %vm129 = vcmp.eq.s32.totalorder %v55, %v116
    %vm130 = vcmp.eq.s32.totalorder %v56, %v116
    %vm131 = vcmp.eq.s32.totalorder %v57, %v116
    %vm132 = vcmp.eq.s32.totalorder %v58, %v116
    %v133 = vsel %vm117, 1, 0
    %v134 = vsel %vm118, 1, 0
    %v135 = vsel %vm119, 1, 0
    %v136 = vsel %vm120, 1, 0
    %v137 = vsel %vm121, 1, 0
    %v138 = vsel %vm122, 1, 0
    %v139 = vsel %vm123, 1, 0
    %v140 = vsel %vm124, 1, 0
    %v141 = vsel %vm125, 1, 0
    %v142 = vsel %vm126, 1, 0
    %v143 = vsel %vm127, 1, 0
    %v144 = vsel %vm128, 1, 0
    %v145 = vsel %vm129, 1, 0
    %v146 = vsel %vm130, 1, 0
    %v147 = vsel %vm131, 1, 0
    %v148 = vsel %vm132, 1, 0
    %v149 = vcvt.s32.f32 %v133
    %v150 = vcvt.s32.f32 %v134
    %v151 = vcvt.s32.f32 %v135
    %v152 = vcvt.s32.f32 %v136
    %v153 = vcvt.s32.f32 %v137
    %v154 = vcvt.s32.f32 %v138
    %v155 = vcvt.s32.f32 %v139
    %v156 = vcvt.s32.f32 %v140
    %v157 = vcvt.s32.f32 %v141
    %v158 = vcvt.s32.f32 %v142
    %v159 = vcvt.s32.f32 %v143
    %v160 = vcvt.s32.f32 %v144
    %v161 = vcvt.s32.f32 %v145
    %v162 = vcvt.s32.f32 %v146
    %v163 = vcvt.s32.f32 %v147
    %v164 = vcvt.s32.f32 %v148
    %v165 = vld [vmem:[#allocation5] sm:$0xff]
    %166 = vmatprep.subr.mxu0 0.0
    %167 = vmatpush1.msra.mxu0 %v96
    %168 = vmatprep.subr.mxu0 0.0
    %169 = vmatpush1.msra.mxu0 %v97
    %170 = vmatprep.subr.mxu0 0.0
    %171 = vmatpush1.msra.mxu0 %v98
    %172 = vmatprep.subr.mxu0 0.0
    %173 = vmatpush1.msra.mxu0 %v99
    %174 = vmatprep.subr.mxu0 0.0
    %175 = vmatpush1.msra.mxu0 %v100
    %176 = vmatprep.subr.mxu0 0.0
    %177 = vmatpush1.msra.mxu0 %v101
    %178 = vmatprep.subr.mxu0 0.0
    %179 = vmatpush1.msra.mxu0 %v102
    %180 = vmatprep.subr.mxu0 0.0
    %181 = vmatpush1.msra.mxu0 %v103
    %182 = vmatprep.subr.mxu0 0.0
    %183 = vmatpush1.msra.mxu0 %v104
    %184 = vmatprep.subr.mxu0 0.0
    %185 = vmatpush1.msra.mxu0 %v105
    %186 = vmatprep.subr.mxu0 0.0
    %187 = vmatpush1.msra.mxu0 %v106
    %188 = vmatprep.subr.mxu0 0.0
    %189 = vmatpush1.msra.mxu0 %v107
    %190 = vmatprep.subr.mxu0 0.0
    %191 = vmatpush1.msra.mxu0 %v108
    %192 = vmatprep.subr.mxu0 0.0
    %193 = vmatpush1.msra.mxu0 %v109
    %194 = vmatprep.subr.mxu0 0.0
    %195 = vmatpush1.msra.mxu0 %v110
    %196 = vmatprep.subr.mxu0 0.0
    %197 = vmatpush1.msra.mxu0 %v111
    %198 = vmatprep.subr.mxu0 0.0
    %199 = vmatpush1.msra.mxu0 0.0
    %200 = vmatprep.subr.mxu0 0.0
    %201 = vmatpush1.msra.mxu0 0.0
    %202 = vmatprep.subr.mxu0 0.0
    %203 = vmatpush1.msra.mxu0 0.0
    %204 = vmatprep.subr.mxu0 0.0
    %205 = vmatpush1.msra.mxu0 0.0
    %206 = vmatprep.subr.mxu0 0.0
    %207 = vmatpush1.msra.mxu0 0.0
    %208 = vmatprep.subr.mxu0 0.0
    %209 = vmatpush1.msra.mxu0 0.0
    %210 = vmatprep.subr.mxu0 0.0
    %211 = vmatpush1.msra.mxu0 0.0
    %212 = vmatprep.subr.mxu0 0.0
    %213 = vmatpush1.msra.mxu0 0.0
    %214 = vmatprep.subr.mxu0 0.0
    %215 = vmatpush1.msra.mxu0 0.0
    %216 = vmatprep.subr.mxu0 0.0
    %217 = vmatpush1.msra.mxu0 0.0
    %218 = vmatprep.subr.mxu0 0.0
    %219 = vmatpush1.msra.mxu0 0.0
    %220 = vmatprep.subr.mxu0 0.0
    %221 = vmatpush1.msra.mxu0 0.0
    %222 = vmatprep.subr.mxu0 0.0
    %223 = vmatpush1.msra.mxu0 0.0
    %224 = vmatprep.subr.mxu0 0.0
    %225 = vmatpush1.msra.mxu0 0.0
    %226 = vmatprep.subr.mxu0 0.0
    %227 = vmatpush1.msra.mxu0 0.0
    %228 = vmatprep.subr.mxu0 0.0
    %229 = vmatpush1.msra.mxu0 0.0
    %230 = vmatprep.mubr.f32.mxu0 0.0
    %231 = vmatmul.mubr.f32.gmra.mrb[0].mxu0 %v165
    %v232 = vpop.f32.mrb[0].mxu0
    %v233 = vadd.f32 0.0, %v232
    %v234 = vpop.f32.mrb[0].mxu0
    %235 = vdwg.mxu0
    %v236 = vld [vmem:[%s3] sm:$0xff]
    %237 = vmatprep.subr.mxu0 0.0
    %238 = vmatpush1.msra.mxu0 %v149
    %239 = vmatprep.subr.mxu0 0.0
    %240 = vmatpush1.msra.mxu0 %v150
    %241 = vmatprep.subr.mxu0 0.0
    %242 = vmatpush1.msra.mxu0 %v151
    %243 = vmatprep.subr.mxu0 0.0
    %244 = vmatpush1.msra.mxu0 %v152
    %245 = vmatprep.subr.mxu0 0.0
    %246 = vmatpush1.msra.mxu0 %v153
    %247 = vmatprep.subr.mxu0 0.0
    %248 = vmatpush1.msra.mxu0 %v154
    %249 = vmatprep.subr.mxu0 0.0
    %250 = vmatpush1.msra.mxu0 %v155
    %251 = vmatprep.subr.mxu0 0.0
    %252 = vmatpush1.msra.mxu0 %v156
    %253 = vmatprep.subr.mxu0 0.0
    %254 = vmatpush1.msra.mxu0 %v157
    %255 = vmatprep.subr.mxu0 0.0
    %256 = vmatpush1.msra.mxu0 %v158
    %257 = vmatprep.subr.mxu0 0.0
    %258 = vmatpush1.msra.mxu0 %v159
    %259 = vmatprep.subr.mxu0 0.0
    %260 = vmatpush1.msra.mxu0 %v160
    %261 = vmatprep.subr.mxu0 0.0
    %262 = vmatpush1.msra.mxu0 %v161
    %263 = vmatprep.subr.mxu0 0.0
    %264 = vmatpush1.msra.mxu0 %v162
    %265 = vmatprep.subr.mxu0 0.0
    %266 = vmatpush1.msra.mxu0 %v163
    %267 = vmatprep.subr.mxu0 0.0
    %268 = vmatpush1.msra.mxu0 %v164
    %269 = vmatprep.subr.mxu0 0.0
    %270 = vmatpush1.msra.mxu0 0.0
    %271 = vmatprep.subr.mxu0 0.0
    %272 = vmatpush1.msra.mxu0 0.0
    %273 = vmatprep.subr.mxu0 0.0
    %274 = vmatpush1.msra.mxu0 0.0
    %275 = vmatprep.subr.mxu0 0.0
    %276 = vmatpush1.msra.mxu0 0.0
    %277 = vmatprep.subr.mxu0 0.0
    %278 = vmatpush1.msra.mxu0 0.0
    %279 = vmatprep.subr.mxu0 0.0
    %280 = vmatpush1.msra.mxu0 0.0
    %281 = vmatprep.subr.mxu0 0.0
    %282 = vmatpush1.msra.mxu0 0.0
    %283 = vmatprep.subr.mxu0 0.0
    %284 = vmatpush1.msra.mxu0 0.0
    %285 = vmatprep.subr.mxu0 0.0
    %286 = vmatpush1.msra.mxu0 0.0
    %287 = vmatprep.subr.mxu0 0.0
    %288 = vmatpush1.msra.mxu0 0.0
    %289 = vmatprep.subr.mxu0 0.0
    %290 = vmatpush1.msra.mxu0 0.0
    %291 = vmatprep.subr.mxu0 0.0
    %292 = vmatpush1.msra.mxu0 0.0
    %293 = vmatprep.subr.mxu0 0.0
    %294 = vmatpush1.msra.mxu0 0.0
    %295 = vmatprep.subr.mxu0 0.0
    %296 = vmatpush1.msra.mxu0 0.0
    %297 = vmatprep.subr.mxu0 0.0
    %298 = vmatpush1.msra.mxu0 0.0
    %299 = vmatprep.subr.mxu0 0.0
    %300 = vmatpush1.msra.mxu0 0.0
    %301 = vmatprep.mubr.f32.mxu0 0.0
    %302 = vmatmul.mubr.f32.gmra.mrb[0].mxu0 %v236
    %v303 = vpop.f32.mrb[0].mxu0
    %v304 = vadd.f32 0.0, %v303
    %v305 = vpop.f32.mrb[0].mxu0
    %306 = vdwg.mxu0
    %v307 = vmul.f32 %v233, %v304
    %v308 = vrot.slane %v307, 4
    %v309 = vadd.f32 %v307, %v308
    %v310 = vrot.slane %v309, 2
    %v311 = vadd.f32 %v309, %v310
    %v312 = vrot.slane %v311, 1
    %v313 = vadd.f32 %v311, %v312
    %314 = vst [vmem:[#allocation7] sm:$0x1] %v313
    // Predicated region
    $region26: #{tpu_custom_call.1} parent=1 // pred_check
      _
    $region27: #{tpu_custom_call.1} parent=1 // pred_check_branch
      %316 = sbr.rel (0) target = $region29
    $region28: #{tpu_custom_call.1} parent=1 // pred_region
      %s318 = ssub.s32 16, 16
      %319 = vsyncadd [#allocation4], %s318
      %s321 = sshll.u32 [#allocation7], 4
      %s322 = int_to_ptr.vmem [resolvable:$true] %s321
      %324 = dma.vmem_to_hbm [thread:$0]  %s322, 16, %s4, [#allocation4]
    $region29: #{tpu_custom_call.1} parent=1 // pred_fallthru
      _
    // Predicated region
    $region30: #{tpu_custom_call.1} parent=1 // pred_check
      _
    $region31: #{tpu_custom_call.1} parent=1 // pred_check_branch
      %326 = sbr.rel (0) target = $region33
    $region32: #{tpu_custom_call.1} parent=1 // pred_region
      %327 = dma.done [#allocation4], 16
    $region33: #{tpu_custom_call.1} parent=1 // pred_fallthru
      _
    %328 = vsyncpa [#allocation3], 1
    %329 = vsyncpa [#allocation6], 1
    %330 = vsyncpa [#allocation4], 1

</llo_original>
